<compile_context>
chip_gen: v5e
topology: v5e:2x2
jax: 0.10.0
libtpu: 0.0.40
codegen_flags: <defaults>
</compile_context>

<pallas_src>
import functools

import jax
import jax.numpy as jnp
from jax.experimental import pallas as pl
from jax.experimental.pallas import tpu as pltpu

_LANES = 128
_SUBLANES = 8


def _converter_kernel(x_ref, w_ref, b_ref, out_ref):
    # x:  (TB, 25)   compute dtype
    # w:  (25, 128)  compute dtype (VMEM-resident across all grid steps)
    # b:  (1, 128)   f32           (VMEM-resident across all grid steps)
    # out:(TB, 128)  out dtype (128-lane-dense -> unmasked stores)
    y = jnp.dot(x_ref[...], w_ref[...], preferred_element_type=jnp.float32)
    out_ref[...] = (y + b_ref[...]).astype(out_ref.dtype)


def fuse_converter_weights(w1, b1, w2, b2, *, compute_dtype=jnp.float32):
    """Exact algebraic fusion of Linear(25->H) . Linear(H->128).

    Hoist this off the per-call hot path: call once per weight update, or keep the
    whole wrapper under jax.jit so XLA constant-folds / fuses it.
    """
    w_fused = (w1 @ w2).astype(compute_dtype)      # (25, 128)
    b_fused = (b1 @ w2 + b2).astype(jnp.float32)   # (1, 128)
    return w_fused, b_fused


def _pick_batch_tile(B, block_b):
    """Batch tile: a multiple of 8 (sublane) or the full batch.

    Large enough to amortize the ~0.35 us per-grid-step overhead, but split into
    at least two grid steps when possible so v7x's two TensorCores both get work
    on the 'parallel' batch axis.
    """
    if B % _SUBLANES != 0 or B <= 2 * _SUBLANES:
        return B  # single full block; avoids ragged sublane tiles
    tb = min(block_b, B)
    if tb == B:
        tb = max(_SUBLANES, ((B // 2 + _SUBLANES - 1) // _SUBLANES) * _SUBLANES)
    return tb


def feature_converter_fused(x, w_fused, b_fused, *, block_b=4096,
                            out_dtype=jnp.float32):
    """(B, 25) @ (25, 128) + (1, 128) -> (B*128,) via a Pallas TPU kernel."""
    B, in_feats = x.shape
    out_feats = w_fused.shape[1]
    x_c = x.astype(w_fused.dtype)

    tb = _pick_batch_tile(B, block_b)
    grid = (pl.cdiv(B, tb),)

    in_itemsize = jnp.dtype(x_c.dtype).itemsize
    out_itemsize = jnp.dtype(out_dtype).itemsize

    # Scoped-VMEM limit: double-buffered x and out tiles (x's K=25 pads to 128 lanes
    # in VMEM) plus the resident weights. v5e's scoped default is only 16 MiB.
    padded_in = ((in_feats + _LANES - 1) // _LANES) * _LANES
    tile_bytes = (2 * tb * padded_in * in_itemsize
                  + 2 * tb * out_feats * out_itemsize)
    const_bytes = padded_in * out_feats * in_itemsize + out_feats * 4
    vmem_limit = int(min(max(1.5 * (tile_bytes + const_bytes) + (1 << 20), 16 << 20),
                         48 << 20))

    cost = pl.CostEstimate(
        flops=2 * B * in_feats * out_feats,
        transcendentals=0,
        bytes_accessed=(B * in_feats * in_itemsize
                        + w_fused.size * in_itemsize
                        + b_fused.size * 4
                        + B * out_feats * out_itemsize),
    )

    out = pl.pallas_call(
        _converter_kernel,
        out_shape=jax.ShapeDtypeStruct((B, out_feats), out_dtype),
        grid=grid,
        in_specs=[
            pl.BlockSpec((tb, in_feats), lambda i: (i, 0)),          # x streams over B
            pl.BlockSpec((in_feats, out_feats), lambda i: (0, 0)),   # fused W: resident
            pl.BlockSpec((1, out_feats), lambda i: (0, 0)),          # fused b: resident
        ],
        out_specs=pl.BlockSpec((tb, out_feats), lambda i: (i, 0)),
        compiler_params=pltpu.CompilerParams(
            dimension_semantics=("parallel",),
            vmem_limit_bytes=vmem_limit,
        ),
        cost_estimate=cost,
    )(x_c, w_fused, b_fused)

    # .flatten() of the PyTorch module -> reshape glue outside the kernel so the output
    # block stays 128-lane-dense inside the kernel.
    return out.reshape(-1)


def feature_converter(x, w1, b1, w2, b2, *, block_b=4096,
                      compute_dtype=jnp.float32, out_dtype=jnp.float32,
                      min_rows_for_kernel=16384, force_kernel=False):
    """Full FeatureConverter.forward: x (B, 25) -> flattened (B*128,).

    Below `min_rows_for_kernel` rows the op is launch-overhead-dominated, so we fall
    back to the fused XLA matmul unless force_kernel=True.
    """
    w_fused, b_fused = fuse_converter_weights(w1, b1, w2, b2,
                                              compute_dtype=compute_dtype)
    B = x.shape[0]
    if force_kernel or B >= min_rows_for_kernel:
        return feature_converter_fused(x, w_fused, b_fused, block_b=block_b,
                                       out_dtype=out_dtype)
    y = (x.astype(compute_dtype) @ w_fused).astype(jnp.float32) + b_fused
    return y.astype(out_dtype).reshape(-1)


if __name__ == "__main__":
    # Module config: FeatureConverter(batch_size=8) -> hidden width H = 8.
    hidden = 8
    B = 2048          # batch rows -> tile picker gives tb=1024, grid=(2,): both v7x TCs work
    IN_FEATS = 25
    OUT_FEATS = 128

    key = jax.random.PRNGKey(0)
    k_x, k_w1, k_b1, k_w2, k_b2 = jax.random.split(key, 5)

    # nn.Linear(25, H), nn.Linear(H, 128) weights stored pre-transposed as
    # (in_features, out_features).
    x = jax.random.normal(k_x, (B, IN_FEATS), dtype=jnp.float32)
    w1 = jax.random.normal(k_w1, (IN_FEATS, hidden), dtype=jnp.float32) * 0.1
    b1 = jax.random.normal(k_b1, (1, hidden), dtype=jnp.float32) * 0.1
    w2 = jax.random.normal(k_w2, (hidden, OUT_FEATS), dtype=jnp.float32) * 0.1
    b2 = jax.random.normal(k_b2, (1, OUT_FEATS), dtype=jnp.float32) * 0.1

    # jit so the weight fusion / casts are folded off the kernel's hot path;
    # force_kernel=True so this run actually exercises the Pallas path.
    run = jax.jit(functools.partial(feature_converter, force_kernel=True))
    out = jax.block_until_ready(run(x, w1, b1, w2, b2))

    # Reference: plain-JAX f32 evaluation of the original two-layer module.
    ref = ((x @ w1 + b1) @ w2 + b2).reshape(-1)
    assert out.shape == (B * OUT_FEATS,), out.shape
    assert jnp.allclose(out, ref, atol=1e-4, rtol=1e-4), "mismatch vs reference"

    print("KERNEL_OK")
</pallas_src>

<mosaic_0001>
module attributes {stable_mosaic.version = 11 : i64} {
  func.func @_converter_kernel(%arg0: i32, %arg1: memref<1024x25xf32, #tpu.memory_space<vmem>>, %arg2: memref<25x128xf32, #tpu.memory_space<vmem>>, %arg3: memref<1x128xf32, #tpu.memory_space<vmem>>, %arg4: memref<1024x128xf32, #tpu.memory_space<vmem>>) attributes {dimension_semantics = [#tpu.dimension_semantics<parallel>], iteration_bounds = array<i64: 2>, scalar_prefetch = 0 : i64, scratch_operands = 0 : i64, tpu.core_type = #tpu.core_type<tc>, window_params = [{transform_indices = @transform_0, window_bounds = array<i64: 1024, 25>}, {pipeline_mode = #tpu.pipeline_mode<synchronous>, transform_indices = @transform_1, window_bounds = array<i64: 25, 128>}, {pipeline_mode = #tpu.pipeline_mode<synchronous>, transform_indices = @transform_2, window_bounds = array<i64: 1, 128>}, {transform_indices = @transform_3, window_bounds = array<i64: 1024, 128>}]} {
    %c0 = arith.constant 0 : index
    %c0_0 = arith.constant 0 : index
    %0 = vector.load %arg1[%c0, %c0_0] : memref<1024x25xf32, #tpu.memory_space<vmem>>, vector<1024x25xf32>
    %c0_1 = arith.constant 0 : index
    %c0_2 = arith.constant 0 : index
    %1 = vector.load %arg2[%c0_1, %c0_2] : memref<25x128xf32, #tpu.memory_space<vmem>>, vector<25x128xf32>
    %cst = arith.constant dense<0.000000e+00> : vector<1024x128xf32>
    %2 = tpu.matmul %0, %1, %cst {dimension_numbers = #tpu.dot_dimension_numbers<[1], [0], [0], [1], [0, 0, 1, 1], [], []>} : vector<1024x25xf32>, vector<25x128xf32>, vector<1024x128xf32> -> vector<1024x128xf32>
    %c0_3 = arith.constant 0 : index
    %c0_4 = arith.constant 0 : index
    %3 = vector.load %arg3[%c0_3, %c0_4] : memref<1x128xf32, #tpu.memory_space<vmem>>, vector<1x128xf32>
    %4 = vector.broadcast %3 : vector<1x128xf32> to vector<1024x128xf32>
    %5 = arith.addf %2, %4 : vector<1024x128xf32>
    %c0_5 = arith.constant 0 : index
    %c0_6 = arith.constant 0 : index
    %6 = vector.load %arg4[%c0_5, %c0_6] : memref<1024x128xf32, #tpu.memory_space<vmem>>, vector<1024x128xf32>
    tpu.vector_store %arg4[%c0_5, %c0_6], %5 {strides = array<i32>} : memref<1024x128xf32, #tpu.memory_space<vmem>>, vector<1024x128xf32>,
    return
  }
  func.func @transform_0(%arg0: i32) -> (i32, i32) {
    %c0_i32 = arith.constant 0 : i32
    %c0_i32_0 = arith.constant 0 : i32
    return %arg0, %c0_i32 : i32, i32
  }
  func.func @transform_1(%arg0: i32) -> (i32, i32) {
    %c0_i32 = arith.constant 0 : i32
    %c0_i32_0 = arith.constant 0 : i32
    %c0_i32_1 = arith.constant 0 : i32
    return %c0_i32, %c0_i32_0 : i32, i32
  }
  func.func @transform_2(%arg0: i32) -> (i32, i32) {
    %c0_i32 = arith.constant 0 : i32
    %c0_i32_0 = arith.constant 0 : i32
    %c0_i32_1 = arith.constant 0 : i32
    return %c0_i32, %c0_i32_0 : i32, i32
  }
  func.func @transform_3(%arg0: i32) -> (i32, i32) {
    %c0_i32 = arith.constant 0 : i32
    %c0_i32_0 = arith.constant 0 : i32
    return %arg0, %c0_i32 : i32, i32
  }
}

</mosaic_0001>

<llo_original>
// kernel: feature_converter.1
$region0: #{feature_converter.1}
  #allocation0 [shape = 'u32[]', space=smem, size = 0x4, offset = 0x4, fixed_abs, tag = 'smem constant byte address 0x4 - core index']
  #allocation1 [shape = 'u32[72,128]{1,0:T(1,128)}', space=vmem, size = 0x9000, scoped, tag = 'internal scratch']
  %s0 = inlined_call_operand.vmem [shape: f32[2048,25], index: 0, kind: input, shape index: {}]
  %s1 = inlined_call_operand.vmem [shape: f32[25,128], index: 1, kind: input, shape index: {}]
  %s2 = inlined_call_operand.vmem [shape: f32[1,128], index: 2, kind: input, shape index: {}]
  %s3 = inlined_call_operand.hbm [shape: f32[2048,128], index: 3, kind: output, shape index: {}]
  %s4 = sld [smem:[#allocation0]]
  $region45: #{feature_converter.1} parent=0
    _
  %s6 = ssub.s32 1, %s4
  %s7 = scalar_select 0, %s6, %s4
  $region1: #{feature_converter.1} parent=0
    #allocation2 [shape = 'u8[1048576]{0}', space=vmem, size = 0x100000, scoped, tag = 'output window, operand 0']
    #allocation3 [shape = 's32[2]{0}', space=sflag, size = 0x8, scoped, tag = 'scoped memory for feature_converter.1']
    %8 = vsyncpa [#allocation3], 0
    %s9 = scalar_lea.sflag [#allocation3], 1
    %10 = vsyncpa %s9, 0
    loop: start=0, step=1, limit=4
    $region2: #{feature_converter.1} parent=1 // loop_pre_header
      _
    $region3: #{feature_converter.1} parent=1 // loop_header
      %s12 = sphi 0, %s16
      %p13 = scmp.ge.s32.totalorder %s12, 4
      %s22 = sphi 0, %s24
      %s25 = sphi 0, %s22
      %s26 = sphi 0, %s25
      %s42 = sphi 0, %s26
      %s46 = sphi 0, %s46
      %s48 = sphi 0, %s46
      %s49 = sphi 0, %s48
      %s63 = sphi 0, %s49
      %s67 = sphi 0, %s67
      %s69 = sphi 0, %s67
      %s70 = sphi 0, %s69
      %s84 = sphi 0, %s70
      %s90 = sphi 0, %s92
      %s93 = sphi 0, %s90
      %s94 = sphi 0, %s93
      %s110 = sphi 0, %s94
    $region4: #{feature_converter.1} parent=1 // loop_header_branch
      %15 = sbr.rel (%p13) target = $region8
    $region5: #{feature_converter.1} parent=1 // loop_body
      %s17 = ssub.s32 %s12, 1
      %s18 = ssub.s32 %s12, 2
      %s19 = sadd.s32 %s12, 1
      %s20 = ssub.s32 %s12, %s19
      %p21 = scmp.eq.s32.totalorder %s20, 0
      %s23 = sadd.s32 %s22, 1
      %s24 = scalar_select %p21, %s22, %s23
      %p27 = pneg %p21
      %p28 = scmp.eq.s32.totalorder %s12, 1
      %p29 = por %p27, %p28
      %p30 = scmp.ne.s32.totalorder %s22, %s25
      %p31 = scmp.eq.s32.totalorder %s12, 0
      %p32 = por %p30, %p31
      %p33 = scmp.ne.s32.totalorder %s22, %s25
      %p34 = scmp.eq.s32.totalorder %s17, 1
      %p35 = por %p33, %p34
      %p36 = scmp.ne.s32.totalorder %s25, %s26
      %p37 = scmp.eq.s32.totalorder %s17, 0
      %p38 = por %p36, %p37
      %p39 = scmp.ne.s32.totalorder %s25, %s26
      %p40 = scmp.eq.s32.totalorder %s18, 1
      %p41 = por %p39, %p40
      %p43 = scmp.ne.s32.totalorder %s26, %s42
      %p44 = scmp.eq.s32.totalorder %s18, 0
      %p45 = por %p43, %p44
      %s47 = sadd.s32 %s46, 1
      %p50 = scmp.eq.s32.totalorder %s12, 1
      %p51 = scmp.ne.s32.totalorder %s46, %s48
      %p52 = scmp.eq.s32.totalorder %s12, 0
      %p53 = por %p51, %p52
      %p54 = scmp.ne.s32.totalorder %s46, %s48
      %p55 = scmp.eq.s32.totalorder %s17, 1
      %p56 = por %p54, %p55
      %p57 = scmp.ne.s32.totalorder %s48, %s49
      %p58 = scmp.eq.s32.totalorder %s17, 0
      %p59 = por %p57, %p58
      %p60 = scmp.ne.s32.totalorder %s48, %s49
      %p61 = scmp.eq.s32.totalorder %s18, 1
      %p62 = por %p60, %p61
      %p64 = scmp.ne.s32.totalorder %s49, %s63
      %p65 = scmp.eq.s32.totalorder %s18, 0
      %p66 = por %p64, %p65
      %s68 = sadd.s32 %s67, 1
      %p71 = scmp.eq.s32.totalorder %s12, 1
      %p72 = scmp.ne.s32.totalorder %s67, %s69
      %p73 = scmp.eq.s32.totalorder %s12, 0
      %p74 = por %p72, %p73
      %p75 = scmp.ne.s32.totalorder %s67, %s69
      %p76 = scmp.eq.s32.totalorder %s17, 1
      %p77 = por %p75, %p76
      %p78 = scmp.ne.s32.totalorder %s69, %s70
      %p79 = scmp.eq.s32.totalorder %s17, 0
      %p80 = por %p78, %p79
      %p81 = scmp.ne.s32.totalorder %s69, %s70
      %p82 = scmp.eq.s32.totalorder %s18, 1
      %p83 = por %p81, %p82
      %p85 = scmp.ne.s32.totalorder %s70, %s84
      %p86 = scmp.eq.s32.totalorder %s18, 0
      %p87 = por %p85, %p86
      %s88 = ssub.s32 %s12, %s19
      %p89 = scmp.eq.s32.totalorder %s88, 0
      %s91 = sadd.s32 %s90, 1
      %s92 = scalar_select %p89, %s90, %s91
      %p95 = pneg %p89
      %p96 = scmp.eq.s32.totalorder %s12, 1
      %p97 = por %p95, %p96
      %p98 = scmp.ne.s32.totalorder %s90, %s93
      %p99 = scmp.eq.s32.totalorder %s12, 0
      %p100 = por %p98, %p99
      %p101 = scmp.ne.s32.totalorder %s90, %s93
      %p102 = scmp.eq.s32.totalorder %s17, 1
      %p103 = por %p101, %p102
      %p104 = scmp.ne.s32.totalorder %s93, %s94
      %p105 = scmp.eq.s32.totalorder %s17, 0
      %p106 = por %p104, %p105
      %p107 = scmp.ne.s32.totalorder %s93, %s94
      %p108 = scmp.eq.s32.totalorder %s18, 1
      %p109 = por %p107, %p108
      %p111 = scmp.ne.s32.totalorder %s94, %s110
      %p112 = scmp.eq.s32.totalorder %s18, 0
      %p113 = por %p111, %p112
      %p114 = scmp.le.s32.totalorder 1, %s12
      %p115 = scmp.lt.s32.totalorder %s12, 3
      %p116 = pnand %p114, %p115
      %p117 = pneg %p116
      // Predicated region
      $region9: #{feature_converter.1} parent=5 // pred_check
        _
      $region10: #{feature_converter.1} parent=5 // pred_check_branch
        %119 = sbr.rel (%p116) target = $region12
      $region11: #{feature_converter.1} parent=5 // pred_region
        %s120 = ssub.s32 %s12, 1
        // Predicated region
        $region13: #{feature_converter.1} parent=11 // pred_check
          %p121 = pneg %p59
        $region14: #{feature_converter.1} parent=11 // pred_check_branch
          %123 = sbr.rel (%p121) target = $region16
        $region15: #{feature_converter.1} parent=11 // pred_region
          _
        $region16: #{feature_converter.1} parent=11 // pred_fallthru
          _
        // Predicated region
        $region17: #{feature_converter.1} parent=11 // pred_check
          %p124 = pneg %p80
        $region18: #{feature_converter.1} parent=11 // pred_check_branch
          %126 = sbr.rel (%p124) target = $region20
        $region19: #{feature_converter.1} parent=11 // pred_region
          _
        $region20: #{feature_converter.1} parent=11 // pred_fallthru
          _
      $region12: #{feature_converter.1} parent=5 // pred_fallthru
        _
      %p127 = scmp.lt.s32.totalorder %s12, 2
      // Predicated region
      $region21: #{feature_converter.1} parent=5 // pred_check
        %p128 = pneg %p127
      $region22: #{feature_converter.1} parent=5 // pred_check_branch
        %130 = sbr.rel (%p128) target = $region24
      $region23: #{feature_converter.1} parent=5 // pred_region
        // Predicated region
        $region25: #{feature_converter.1} parent=23 // pred_check
          %p131 = pneg %p32
        $region26: #{feature_converter.1} parent=23 // pred_check_branch
          %133 = sbr.rel (%p131) target = $region28
        $region27: #{feature_converter.1} parent=23 // pred_region
          %s134 = smul.u32 128, %s12
          %p135 = scmp.lt.s32.totalorder %s134, 255
          %s136 = scalar_select %p135, %s134, 255
          %s137 = smul.addr %s136, 8
          %s138 = scalar_lea.vmem %s0, %s137
          %s139 = smul.u32 128, %s12
        $region28: #{feature_converter.1} parent=23 // pred_fallthru
          _
      $region24: #{feature_converter.1} parent=5 // pred_fallthru
        _
      %p140 = scmp.le.s32.totalorder 1, %s12
      %p141 = scmp.lt.s32.totalorder %s12, 3
      %p142 = pnand %p140, %p141
      %p143 = pneg %p142
      // Predicated region
      $region29: #{feature_converter.1} parent=5 // pred_check
        _
      $region30: #{feature_converter.1} parent=5 // pred_check_branch
        %145 = sbr.rel (%p142) target = $region32
      $region31: #{feature_converter.1} parent=5 // pred_region
        %s146 = ssub.s32 %s12, 1
        %s147 = smul.u32 128, %s17
        %p148 = scmp.lt.s32.totalorder %s147, 255
        %s149 = scalar_select %p148, %s147, 255
        %s150 = smul.addr %s149, 8
        %s151 = scalar_lea.vmem %s0, %s150
        %p152 = pneg %p38
        %p153 = pneg %p35
        %p154 = pneg %p59
        %p155 = pneg %p56
        %p156 = pneg %p80
        %p157 = pneg %p77
        %p158 = pneg %p106
        %p159 = pneg %p103
        %s160 = sand.u32 %s93, 1
        %s161 = scalar_lea.sflag [#allocation3], %s160
        %s162 = sand.u32 %s93, 1
        %s163 = smul.addr %s162, 1024
        %s164 = scalar_lea.vmem [#allocation2], %s163
        %s165 = smul.u32 128, %s17
        %p166 = scmp.lt.s32.totalorder %s165, 255
        %s167 = scalar_select %p166, %s165, 255
        %s168 = smul.addr %s167, 8
        %s169 = scalar_lea.vmem %s0, %s168
        %s170 = smul.u32 128, %s17
        %s171 = smul.u32 128, %s17
        %v172 = vld [vmem:[%s169] sm:$0xff]
        %v173 = vld [vmem:[%s169 + $0x8] sm:$0xff]
        %v174 = vld [vmem:[%s169 + $0x10] sm:$0xff]
        %v175 = vld [vmem:[%s169 + $0x18] sm:$0xff]
        %v176 = vld [vmem:[%s169 + $0x20] sm:$0xff]
        %v177 = vld [vmem:[%s169 + $0x28] sm:$0xff]
        %v178 = vld [vmem:[%s169 + $0x30] sm:$0xff]
        %v179 = vld [vmem:[%s169 + $0x38] sm:$0xff]
        %v180 = vld [vmem:[%s169 + $0x40] sm:$0xff]
        %v181 = vld [vmem:[%s169 + $0x48] sm:$0xff]
        %v182 = vld [vmem:[%s169 + $0x50] sm:$0xff]
        %v183 = vld [vmem:[%s169 + $0x58] sm:$0xff]
        %v184 = vld [vmem:[%s169 + $0x60] sm:$0xff]
        %v185 = vld [vmem:[%s169 + $0x68] sm:$0xff]
        %v186 = vld [vmem:[%s169 + $0x70] sm:$0xff]
        %v187 = vld [vmem:[%s169 + $0x78] sm:$0xff]
        %v188 = vld [vmem:[%s169 + $0x80] sm:$0xff]
        %v189 = vld [vmem:[%s169 + $0x88] sm:$0xff]
        %v190 = vld [vmem:[%s169 + $0x90] sm:$0xff]
        %v191 = vld [vmem:[%s169 + $0x98] sm:$0xff]
        %v192 = vld [vmem:[%s169 + $0xa0] sm:$0xff]
        %v193 = vld [vmem:[%s169 + $0xa8] sm:$0xff]
        %v194 = vld [vmem:[%s169 + $0xb0] sm:$0xff]
        %v195 = vld [vmem:[%s169 + $0xb8] sm:$0xff]
        %v196 = vld [vmem:[%s169 + $0xc0] sm:$0xff]
        %v197 = vld [vmem:[%s169 + $0xc8] sm:$0xff]
        %v198 = vld [vmem:[%s169 + $0xd0] sm:$0xff]
        %v199 = vld [vmem:[%s169 + $0xd8] sm:$0xff]
        %v200 = vld [vmem:[%s169 + $0xe0] sm:$0xff]
        %v201 = vld [vmem:[%s169 + $0xe8] sm:$0xff]
        %v202 = vld [vmem:[%s169 + $0xf0] sm:$0xff]
        %v203 = vld [vmem:[%s169 + $0xf8] sm:$0xff]
        %v204 = vld [vmem:[%s169 + $0x100] sm:$0xff]
        %v205 = vld [vmem:[%s169 + $0x108] sm:$0xff]
        %v206 = vld [vmem:[%s169 + $0x110] sm:$0xff]
        %v207 = vld [vmem:[%s169 + $0x118] sm:$0xff]
        %v208 = vld [vmem:[%s169 + $0x120] sm:$0xff]
        %v209 = vld [vmem:[%s169 + $0x128] sm:$0xff]
        %v210 = vld [vmem:[%s169 + $0x130] sm:$0xff]
        %v211 = vld [vmem:[%s169 + $0x138] sm:$0xff]
        %v212 = vld [vmem:[%s169 + $0x140] sm:$0xff]
        %v213 = vld [vmem:[%s169 + $0x148] sm:$0xff]
        %v214 = vld [vmem:[%s169 + $0x150] sm:$0xff]
        %v215 = vld [vmem:[%s169 + $0x158] sm:$0xff]
        %v216 = vld [vmem:[%s169 + $0x160] sm:$0xff]
        %v217 = vld [vmem:[%s169 + $0x168] sm:$0xff]
        %v218 = vld [vmem:[%s169 + $0x170] sm:$0xff]
        %v219 = vld [vmem:[%s169 + $0x178] sm:$0xff]
        %v220 = vld [vmem:[%s169 + $0x180] sm:$0xff]
        %v221 = vld [vmem:[%s169 + $0x188] sm:$0xff]
        %v222 = vld [vmem:[%s169 + $0x190] sm:$0xff]
        %v223 = vld [vmem:[%s169 + $0x198] sm:$0xff]
        %v224 = vld [vmem:[%s169 + $0x1a0] sm:$0xff]
        %v225 = vld [vmem:[%s169 + $0x1a8] sm:$0xff]
        %v226 = vld [vmem:[%s169 + $0x1b0] sm:$0xff]
        %v227 = vld [vmem:[%s169 + $0x1b8] sm:$0xff]
        %v228 = vld [vmem:[%s169 + $0x1c0] sm:$0xff]
        %v229 = vld [vmem:[%s169 + $0x1c8] sm:$0xff]
        %v230 = vld [vmem:[%s169 + $0x1d0] sm:$0xff]
        %v231 = vld [vmem:[%s169 + $0x1d8] sm:$0xff]
        %v232 = vld [vmem:[%s169 + $0x1e0] sm:$0xff]
        %v233 = vld [vmem:[%s169 + $0x1e8] sm:$0xff]
        %v234 = vld [vmem:[%s169 + $0x1f0] sm:$0xff]
        %v235 = vld [vmem:[%s169 + $0x1f8] sm:$0xff]
        %v236 = vld [vmem:[%s169 + $0x200] sm:$0xff]
        %v237 = vld [vmem:[%s169 + $0x208] sm:$0xff]
        %v238 = vld [vmem:[%s169 + $0x210] sm:$0xff]
        %v239 = vld [vmem:[%s169 + $0x218] sm:$0xff]
        %v240 = vld [vmem:[%s169 + $0x220] sm:$0xff]
        %v241 = vld [vmem:[%s169 + $0x228] sm:$0xff]
        %v242 = vld [vmem:[%s169 + $0x230] sm:$0xff]
        %v243 = vld [vmem:[%s169 + $0x238] sm:$0xff]
        %v244 = vld [vmem:[%s169 + $0x240] sm:$0xff]
        %v245 = vld [vmem:[%s169 + $0x248] sm:$0xff]
        %v246 = vld [vmem:[%s169 + $0x250] sm:$0xff]
        %v247 = vld [vmem:[%s169 + $0x258] sm:$0xff]
        %v248 = vld [vmem:[%s169 + $0x260] sm:$0xff]
        %v249 = vld [vmem:[%s169 + $0x268] sm:$0xff]
        %v250 = vld [vmem:[%s169 + $0x270] sm:$0xff]
        %v251 = vld [vmem:[%s169 + $0x278] sm:$0xff]
        %v252 = vld [vmem:[%s169 + $0x280] sm:$0xff]
        %v253 = vld [vmem:[%s169 + $0x288] sm:$0xff]
        %v254 = vld [vmem:[%s169 + $0x290] sm:$0xff]
        %v255 = vld [vmem:[%s169 + $0x298] sm:$0xff]
        %v256 = vld [vmem:[%s169 + $0x2a0] sm:$0xff]
        %v257 = vld [vmem:[%s169 + $0x2a8] sm:$0xff]
        %v258 = vld [vmem:[%s169 + $0x2b0] sm:$0xff]
        %v259 = vld [vmem:[%s169 + $0x2b8] sm:$0xff]
        %v260 = vld [vmem:[%s169 + $0x2c0] sm:$0xff]
        %v261 = vld [vmem:[%s169 + $0x2c8] sm:$0xff]
        %v262 = vld [vmem:[%s169 + $0x2d0] sm:$0xff]
        %v263 = vld [vmem:[%s169 + $0x2d8] sm:$0xff]
        %v264 = vld [vmem:[%s169 + $0x2e0] sm:$0xff]
        %v265 = vld [vmem:[%s169 + $0x2e8] sm:$0xff]
        %v266 = vld [vmem:[%s169 + $0x2f0] sm:$0xff]
        %v267 = vld [vmem:[%s169 + $0x2f8] sm:$0xff]
        %v268 = vld [vmem:[%s169 + $0x300] sm:$0xff]
        %v269 = vld [vmem:[%s169 + $0x308] sm:$0xff]
        %v270 = vld [vmem:[%s169 + $0x310] sm:$0xff]
        %v271 = vld [vmem:[%s169 + $0x318] sm:$0xff]
        %v272 = vld [vmem:[%s169 + $0x320] sm:$0xff]
        %v273 = vld [vmem:[%s169 + $0x328] sm:$0xff]
        %v274 = vld [vmem:[%s169 + $0x330] sm:$0xff]
        %v275 = vld [vmem:[%s169 + $0x338] sm:$0xff]
        %v276 = vld [vmem:[%s169 + $0x340] sm:$0xff]
        %v277 = vld [vmem:[%s169 + $0x348] sm:$0xff]
        %v278 = vld [vmem:[%s169 + $0x350] sm:$0xff]
        %v279 = vld [vmem:[%s169 + $0x358] sm:$0xff]
        %v280 = vld [vmem:[%s169 + $0x360] sm:$0xff]
        %v281 = vld [vmem:[%s169 + $0x368] sm:$0xff]
        %v282 = vld [vmem:[%s169 + $0x370] sm:$0xff]
        %v283 = vld [vmem:[%s169 + $0x378] sm:$0xff]
        %v284 = vld [vmem:[%s169 + $0x380] sm:$0xff]
        %v285 = vld [vmem:[%s169 + $0x388] sm:$0xff]
        %v286 = vld [vmem:[%s169 + $0x390] sm:$0xff]
        %v287 = vld [vmem:[%s169 + $0x398] sm:$0xff]
        %v288 = vld [vmem:[%s169 + $0x3a0] sm:$0xff]
        %v289 = vld [vmem:[%s169 + $0x3a8] sm:$0xff]
        %v290 = vld [vmem:[%s169 + $0x3b0] sm:$0xff]
        %v291 = vld [vmem:[%s169 + $0x3b8] sm:$0xff]
        %v292 = vld [vmem:[%s169 + $0x3c0] sm:$0xff]
        %v293 = vld [vmem:[%s169 + $0x3c8] sm:$0xff]
        %v294 = vld [vmem:[%s169 + $0x3d0] sm:$0xff]
        %v295 = vld [vmem:[%s169 + $0x3d8] sm:$0xff]
        %v296 = vld [vmem:[%s169 + $0x3e0] sm:$0xff]
        %v297 = vld [vmem:[%s169 + $0x3e8] sm:$0xff]
        %v298 = vld [vmem:[%s169 + $0x3f0] sm:$0xff]
        %v299 = vld [vmem:[%s169 + $0x3f8] sm:$0xff]
        %v300 = vld [vmem:[%s1] sm:$0xff]
        %v301 = vld [vmem:[%s1 + $0x8] sm:$0xff]
        %v302 = vld [vmem:[%s1 + $0x10] sm:$0xff]
        %v303 = vld [vmem:[%s1 + $0x18] sm:$0x1]
        %v304 = vld [vmem:[%s2] sm:$0x1]
        %v306 = vperm.slane %v304, 0
        %vm308 = vcmask 203776
        %v310 = vsel %vm308, %v172, 0
        %v313 = vsel %vm308, %v173, 0
        %v316 = vsel %vm308, %v174, 0
        %v319 = vsel %vm308, %v175, 0
        %v322 = vsel %vm308, %v176, 0
        %v325 = vsel %vm308, %v177, 0
        %v328 = vsel %vm308, %v178, 0
        %v331 = vsel %vm308, %v179, 0
        %v334 = vsel %vm308, %v180, 0
        %v337 = vsel %vm308, %v181, 0
        %v340 = vsel %vm308, %v182, 0
        %v343 = vsel %vm308, %v183, 0
        %v346 = vsel %vm308, %v184, 0
        %v349 = vsel %vm308, %v185, 0
        %v352 = vsel %vm308, %v186, 0
        %v355 = vsel %vm308, %v187, 0
        %v358 = vsel %vm308, %v188, 0
        %v361 = vsel %vm308, %v189, 0
        %v364 = vsel %vm308, %v190, 0
        %v367 = vsel %vm308, %v191, 0
        %v370 = vsel %vm308, %v192, 0
        %v373 = vsel %vm308, %v193, 0
        %v376 = vsel %vm308, %v194, 0
        %v379 = vsel %vm308, %v195, 0
        %v382 = vsel %vm308, %v196, 0
        %v385 = vsel %vm308, %v197, 0
        %v388 = vsel %vm308, %v198, 0
        %v391 = vsel %vm308, %v199, 0
        %v394 = vsel %vm308, %v200, 0
        %v397 = vsel %vm308, %v201, 0
        %v400 = vsel %vm308, %v202, 0
        %v403 = vsel %vm308, %v203, 0
        %v406 = vsel %vm308, %v204, 0
        %v409 = vsel %vm308, %v205, 0
        %v412 = vsel %vm308, %v206, 0
        %v415 = vsel %vm308, %v207, 0
        %v418 = vsel %vm308, %v208, 0
        %v421 = vsel %vm308, %v209, 0
        %v424 = vsel %vm308, %v210, 0
        %v427 = vsel %vm308, %v211, 0
        %v430 = vsel %vm308, %v212, 0
        %v433 = vsel %vm308, %v213, 0
        %v436 = vsel %vm308, %v214, 0
        %v439 = vsel %vm308, %v215, 0
        %v442 = vsel %vm308, %v216, 0
        %v445 = vsel %vm308, %v217, 0
        %v448 = vsel %vm308, %v218, 0
        %v451 = vsel %vm308, %v219, 0
        %v454 = vsel %vm308, %v220, 0
        %v457 = vsel %vm308, %v221, 0
        %v460 = vsel %vm308, %v222, 0
        %v463 = vsel %vm308, %v223, 0
        %v466 = vsel %vm308, %v224, 0
        %v469 = vsel %vm308, %v225, 0
        %v472 = vsel %vm308, %v226, 0
        %v475 = vsel %vm308, %v227, 0
        %v478 = vsel %vm308, %v228, 0
        %v481 = vsel %vm308, %v229, 0
        %v484 = vsel %vm308, %v230, 0
        %v487 = vsel %vm308, %v231, 0
        %v490 = vsel %vm308, %v232, 0
        %v493 = vsel %vm308, %v233, 0
        %v496 = vsel %vm308, %v234, 0
        %v499 = vsel %vm308, %v235, 0
        %v502 = vsel %vm308, %v236, 0
        %v505 = vsel %vm308, %v237, 0
        %v508 = vsel %vm308, %v238, 0
        %v511 = vsel %vm308, %v239, 0
        %v514 = vsel %vm308, %v240, 0
        %v517 = vsel %vm308, %v241, 0
        %v520 = vsel %vm308, %v242, 0
        %v523 = vsel %vm308, %v243, 0
        %v526 = vsel %vm308, %v244, 0
        %v529 = vsel %vm308, %v245, 0
        %v532 = vsel %vm308, %v246, 0
        %v535 = vsel %vm308, %v247, 0
        %v538 = vsel %vm308, %v248, 0
        %v541 = vsel %vm308, %v249, 0
        %v544 = vsel %vm308, %v250, 0
        %v547 = vsel %vm308, %v251, 0
        %v550 = vsel %vm308, %v252, 0
        %v553 = vsel %vm308, %v253, 0
        %v556 = vsel %vm308, %v254, 0
        %v559 = vsel %vm308, %v255, 0
        %v562 = vsel %vm308, %v256, 0
        %v565 = vsel %vm308, %v257, 0
        %v568 = vsel %vm308, %v258, 0
        %v571 = vsel %vm308, %v259, 0
        %v574 = vsel %vm308, %v260, 0
        %v577 = vsel %vm308, %v261, 0
        %v580 = vsel %vm308, %v262, 0
        %v583 = vsel %vm308, %v263, 0
        %v586 = vsel %vm308, %v264, 0
        %v589 = vsel %vm308, %v265, 0
        %v592 = vsel %vm308, %v266, 0
        %v595 = vsel %vm308, %v267, 0
        %v598 = vsel %vm308, %v268, 0
        %v601 = vsel %vm308, %v269, 0
        %v604 = vsel %vm308, %v270, 0
        %v607 = vsel %vm308, %v271, 0
        %v610 = vsel %vm308, %v272, 0
        %v613 = vsel %vm308, %v273, 0
        %v616 = vsel %vm308, %v274, 0
        %v619 = vsel %vm308, %v275, 0
        %v622 = vsel %vm308, %v276, 0
        %v625 = vsel %vm308, %v277, 0
        %v628 = vsel %vm308, %v278, 0
        %v631 = vsel %vm308, %v279, 0
        %v634 = vsel %vm308, %v280, 0
        %v637 = vsel %vm308, %v281, 0
        %v640 = vsel %vm308, %v282, 0
        %v643 = vsel %vm308, %v283, 0
        %v646 = vsel %vm308, %v284, 0
        %v649 = vsel %vm308, %v285, 0
        %v652 = vsel %vm308, %v286, 0
        %v655 = vsel %vm308, %v287, 0
        %v658 = vsel %vm308, %v288, 0
        %v661 = vsel %vm308, %v289, 0
        %v664 = vsel %vm308, %v290, 0
        %v667 = vsel %vm308, %v291, 0
        %v670 = vsel %vm308, %v292, 0
        %v673 = vsel %vm308, %v293, 0
        %v676 = vsel %vm308, %v294, 0
        %v679 = vsel %vm308, %v295, 0
        %v682 = vsel %vm308, %v296, 0
        %v685 = vsel %vm308, %v297, 0
        %v688 = vsel %vm308, %v298, 0
        %v691 = vsel %vm308, %v299, 0
        %vm693 = vcmask 1040384
        %v695 = vsel %vm693, %v303, 0
        %697 = vmatpush.msra.mxu0 0.0
        %698 = vmatpush.msra.mxu0 0.0
        %699 = vmatpush.msra.mxu0 0.0
        %700 = vmatpush.msra.mxu0 0.0
        %701 = vmatpush.msra.mxu0 0.0
        %702 = vmatpush.msra.mxu0 0.0
        %703 = vmatpush.msra.mxu0 0.0
        %704 = vmatpush.msra.mxu0 0.0
        %705 = vmatpush.msra.mxu0 0.0
        %706 = vmatpush.msra.mxu0 0.0
        %707 = vmatpush.msra.mxu0 0.0
        %708 = vmatpush.msra.mxu0 0.0
        %709 = vmatpush.msra.mxu0 %v695
        %710 = vmatpush.msra.mxu0 %v302
        %711 = vmatpush.msra.mxu0 %v301
        %712 = vmatpush.msra.mxu0 %v300
        %713 = vmatmul.f32.gmra.mxu0 %v310
        %v714 = vpop.f32.mrf.mxu0
        %v715 = vadd.f32 %v306, %v714
        %716 = vmatmul.f32.gmra.mxu0 %v313
        %v717 = vpop.f32.mrf.mxu0
        %v718 = vadd.f32 %v306, %v717
        %719 = vmatmul.f32.gmra.mxu0 %v316
        %v720 = vpop.f32.mrf.mxu0
        %v721 = vadd.f32 %v306, %v720
        %722 = vmatmul.f32.gmra.mxu0 %v319
        %v723 = vpop.f32.mrf.mxu0
        %v724 = vadd.f32 %v306, %v723
        %725 = vmatmul.f32.gmra.mxu0 %v322
        %v726 = vpop.f32.mrf.mxu0
        %v727 = vadd.f32 %v306, %v726
        %728 = vmatmul.f32.gmra.mxu0 %v325
        %v729 = vpop.f32.mrf.mxu0
        %v730 = vadd.f32 %v306, %v729
        %731 = vmatmul.f32.gmra.mxu0 %v328
        %v732 = vpop.f32.mrf.mxu0
        %v733 = vadd.f32 %v306, %v732
        %734 = vmatmul.f32.gmra.mxu0 %v331
        %v735 = vpop.f32.mrf.mxu0
        %v736 = vadd.f32 %v306, %v735
        %737 = vmatmul.f32.gmra.mxu0 %v334
        %v738 = vpop.f32.mrf.mxu0
        %v739 = vadd.f32 %v306, %v738
        %740 = vmatmul.f32.gmra.mxu0 %v337
        %v741 = vpop.f32.mrf.mxu0
        %v742 = vadd.f32 %v306, %v741
        %743 = vmatmul.f32.gmra.mxu0 %v340
        %v744 = vpop.f32.mrf.mxu0
        %v745 = vadd.f32 %v306, %v744
        %746 = vmatmul.f32.gmra.mxu0 %v343
        %v747 = vpop.f32.mrf.mxu0
        %v748 = vadd.f32 %v306, %v747
        %749 = vmatmul.f32.gmra.mxu0 %v346
        %v750 = vpop.f32.mrf.mxu0
        %v751 = vadd.f32 %v306, %v750
        %752 = vmatmul.f32.gmra.mxu0 %v349
        %v753 = vpop.f32.mrf.mxu0
        %v754 = vadd.f32 %v306, %v753
        %755 = vmatmul.f32.gmra.mxu0 %v352
        %v756 = vpop.f32.mrf.mxu0
        %v757 = vadd.f32 %v306, %v756
        %758 = vmatmul.f32.gmra.mxu0 %v355
        %v759 = vpop.f32.mrf.mxu0
        %v760 = vadd.f32 %v306, %v759
        %761 = vmatmul.f32.gmra.mxu0 %v358
        %v762 = vpop.f32.mrf.mxu0
        %v763 = vadd.f32 %v306, %v762
        %764 = vmatmul.f32.gmra.mxu0 %v361
        %v765 = vpop.f32.mrf.mxu0
        %v766 = vadd.f32 %v306, %v765
        %767 = vmatmul.f32.gmra.mxu0 %v364
        %v768 = vpop.f32.mrf.mxu0
        %v769 = vadd.f32 %v306, %v768
        %770 = vmatmul.f32.gmra.mxu0 %v367
        %v771 = vpop.f32.mrf.mxu0
        %v772 = vadd.f32 %v306, %v771
        %773 = vmatmul.f32.gmra.mxu0 %v370
        %v774 = vpop.f32.mrf.mxu0
        %v775 = vadd.f32 %v306, %v774
        %776 = vmatmul.f32.gmra.mxu0 %v373
        %v777 = vpop.f32.mrf.mxu0
        %v778 = vadd.f32 %v306, %v777
        %779 = vmatmul.f32.gmra.mxu0 %v376
        %v780 = vpop.f32.mrf.mxu0
        %v781 = vadd.f32 %v306, %v780
        %782 = vmatmul.f32.gmra.mxu0 %v379
        %v783 = vpop.f32.mrf.mxu0
        %v784 = vadd.f32 %v306, %v783
        %785 = vmatmul.f32.gmra.mxu0 %v382
        %v786 = vpop.f32.mrf.mxu0
        %v787 = vadd.f32 %v306, %v786
        %788 = vmatmul.f32.gmra.mxu0 %v385
        %v789 = vpop.f32.mrf.mxu0
        %v790 = vadd.f32 %v306, %v789
        %791 = vmatmul.f32.gmra.mxu0 %v388
        %v792 = vpop.f32.mrf.mxu0
        %v793 = vadd.f32 %v306, %v792
        %794 = vmatmul.f32.gmra.mxu0 %v391
        %v795 = vpop.f32.mrf.mxu0
        %v796 = vadd.f32 %v306, %v795
        %797 = vmatmul.f32.gmra.mxu0 %v394
        %v798 = vpop.f32.mrf.mxu0
        %v799 = vadd.f32 %v306, %v798
        %800 = vmatmul.f32.gmra.mxu0 %v397
        %v801 = vpop.f32.mrf.mxu0
        %v802 = vadd.f32 %v306, %v801
        %803 = vmatmul.f32.gmra.mxu0 %v400
        %v804 = vpop.f32.mrf.mxu0
        %v805 = vadd.f32 %v306, %v804
        %806 = vmatmul.f32.gmra.mxu0 %v403
        %v807 = vpop.f32.mrf.mxu0
        %v808 = vadd.f32 %v306, %v807
        %809 = vmatmul.f32.gmra.mxu0 %v406
        %v810 = vpop.f32.mrf.mxu0
        %v811 = vadd.f32 %v306, %v810
        %812 = vmatmul.f32.gmra.mxu0 %v409
        %v813 = vpop.f32.mrf.mxu0
        %v814 = vadd.f32 %v306, %v813
        %815 = vmatmul.f32.gmra.mxu0 %v412
        %v816 = vpop.f32.mrf.mxu0
        %v817 = vadd.f32 %v306, %v816
        %818 = vmatmul.f32.gmra.mxu0 %v415
        %v819 = vpop.f32.mrf.mxu0
        %v820 = vadd.f32 %v306, %v819
        %821 = vmatmul.f32.gmra.mxu0 %v418
        %v822 = vpop.f32.mrf.mxu0
        %v823 = vadd.f32 %v306, %v822
        %824 = vmatmul.f32.gmra.mxu0 %v421
        %v825 = vpop.f32.mrf.mxu0
        %v826 = vadd.f32 %v306, %v825
        %827 = vmatmul.f32.gmra.mxu0 %v424
        %v828 = vpop.f32.mrf.mxu0
        %v829 = vadd.f32 %v306, %v828
        %830 = vmatmul.f32.gmra.mxu0 %v427
        %v831 = vpop.f32.mrf.mxu0
        %v832 = vadd.f32 %v306, %v831
        %833 = vmatmul.f32.gmra.mxu0 %v430
        %v834 = vpop.f32.mrf.mxu0
        %v835 = vadd.f32 %v306, %v834
        %836 = vmatmul.f32.gmra.mxu0 %v433
        %v837 = vpop.f32.mrf.mxu0
        %v838 = vadd.f32 %v306, %v837
        %839 = vmatmul.f32.gmra.mxu0 %v436
        %v840 = vpop.f32.mrf.mxu0
        %v841 = vadd.f32 %v306, %v840
        %842 = vmatmul.f32.gmra.mxu0 %v439
        %v843 = vpop.f32.mrf.mxu0
        %v844 = vadd.f32 %v306, %v843
        %845 = vmatmul.f32.gmra.mxu0 %v442
        %v846 = vpop.f32.mrf.mxu0
        %v847 = vadd.f32 %v306, %v846
        %848 = vmatmul.f32.gmra.mxu0 %v445
        %v849 = vpop.f32.mrf.mxu0
        %v850 = vadd.f32 %v306, %v849
        %851 = vmatmul.f32.gmra.mxu0 %v448
        %v852 = vpop.f32.mrf.mxu0
        %v853 = vadd.f32 %v306, %v852
        %854 = vmatmul.f32.gmra.mxu0 %v451
        %v855 = vpop.f32.mrf.mxu0
        %v856 = vadd.f32 %v306, %v855
        %857 = vmatmul.f32.gmra.mxu0 %v454
        %v858 = vpop.f32.mrf.mxu0
        %v859 = vadd.f32 %v306, %v858
        %860 = vmatmul.f32.gmra.mxu0 %v457
        %v861 = vpop.f32.mrf.mxu0
        %v862 = vadd.f32 %v306, %v861
        %863 = vmatmul.f32.gmra.mxu0 %v460
        %v864 = vpop.f32.mrf.mxu0
        %v865 = vadd.f32 %v306, %v864
        %866 = vmatmul.f32.gmra.mxu0 %v463
        %v867 = vpop.f32.mrf.mxu0
        %v868 = vadd.f32 %v306, %v867
        %869 = vmatmul.f32.gmra.mxu0 %v466
        %v870 = vpop.f32.mrf.mxu0
        %v871 = vadd.f32 %v306, %v870
        %872 = vmatmul.f32.gmra.mxu0 %v469
        %v873 = vpop.f32.mrf.mxu0
        %v874 = vadd.f32 %v306, %v873
        %875 = vmatmul.f32.gmra.mxu0 %v472
        %v876 = vpop.f32.mrf.mxu0
        %v877 = vadd.f32 %v306, %v876
        %878 = vmatmul.f32.gmra.mxu0 %v475
        %v879 = vpop.f32.mrf.mxu0
        %v880 = vadd.f32 %v306, %v879
        %881 = vmatmul.f32.gmra.mxu0 %v478
        %v882 = vpop.f32.mrf.mxu0
        %v883 = vadd.f32 %v306, %v882
        %884 = vmatmul.f32.gmra.mxu0 %v481
        %v885 = vpop.f32.mrf.mxu0
        %v886 = vadd.f32 %v306, %v885
        %887 = vmatmul.f32.gmra.mxu0 %v484
        %v888 = vpop.f32.mrf.mxu0
        %v889 = vadd.f32 %v306, %v888
        %890 = vmatmul.f32.gmra.mxu0 %v487
        %v891 = vpop.f32.mrf.mxu0
        %v892 = vadd.f32 %v306, %v891
        %893 = vmatmul.f32.gmra.mxu0 %v490
        %v894 = vpop.f32.mrf.mxu0
        %v895 = vadd.f32 %v306, %v894
        %896 = vmatmul.f32.gmra.mxu0 %v493
        %v897 = vpop.f32.mrf.mxu0
        %v898 = vadd.f32 %v306, %v897
        %899 = vmatmul.f32.gmra.mxu0 %v496
        %v900 = vpop.f32.mrf.mxu0
        %v901 = vadd.f32 %v306, %v900
        %902 = vmatmul.f32.gmra.mxu0 %v499
        %v903 = vpop.f32.mrf.mxu0
        %v904 = vadd.f32 %v306, %v903
        %905 = vmatmul.f32.gmra.mxu0 %v502
        %v906 = vpop.f32.mrf.mxu0
        %v907 = vadd.f32 %v306, %v906
        %908 = vmatmul.f32.gmra.mxu0 %v505
        %v909 = vpop.f32.mrf.mxu0
        %v910 = vadd.f32 %v306, %v909
        %911 = vmatmul.f32.gmra.mxu0 %v508
        %v912 = vpop.f32.mrf.mxu0
        %v913 = vadd.f32 %v306, %v912
        %914 = vmatmul.f32.gmra.mxu0 %v511
        %v915 = vpop.f32.mrf.mxu0
        %v916 = vadd.f32 %v306, %v915
        %917 = vmatmul.f32.gmra.mxu0 %v514
        %v918 = vpop.f32.mrf.mxu0
        %v919 = vadd.f32 %v306, %v918
        %920 = vmatmul.f32.gmra.mxu0 %v517
        %v921 = vpop.f32.mrf.mxu0
        %v922 = vadd.f32 %v306, %v921
        %923 = vmatmul.f32.gmra.mxu0 %v520
        %v924 = vpop.f32.mrf.mxu0
        %v925 = vadd.f32 %v306, %v924
        %926 = vmatmul.f32.gmra.mxu0 %v523
        %v927 = vpop.f32.mrf.mxu0
        %v928 = vadd.f32 %v306, %v927
        %929 = vmatmul.f32.gmra.mxu0 %v526
        %v930 = vpop.f32.mrf.mxu0
        %v931 = vadd.f32 %v306, %v930
        %932 = vmatmul.f32.gmra.mxu0 %v529
        %v933 = vpop.f32.mrf.mxu0
        %v934 = vadd.f32 %v306, %v933
        %935 = vmatmul.f32.gmra.mxu0 %v532
        %v936 = vpop.f32.mrf.mxu0
        %v937 = vadd.f32 %v306, %v936
        %938 = vmatmul.f32.gmra.mxu0 %v535
        %v939 = vpop.f32.mrf.mxu0
        %v940 = vadd.f32 %v306, %v939
        %941 = vmatmul.f32.gmra.mxu0 %v538
        %v942 = vpop.f32.mrf.mxu0
        %v943 = vadd.f32 %v306, %v942
        %944 = vmatmul.f32.gmra.mxu0 %v541
        %v945 = vpop.f32.mrf.mxu0
        %v946 = vadd.f32 %v306, %v945
        %947 = vmatmul.f32.gmra.mxu0 %v544
        %v948 = vpop.f32.mrf.mxu0
        %v949 = vadd.f32 %v306, %v948
        %950 = vmatmul.f32.gmra.mxu0 %v547
        %v951 = vpop.f32.mrf.mxu0
        %v952 = vadd.f32 %v306, %v951
        %953 = vmatmul.f32.gmra.mxu0 %v550
        %v954 = vpop.f32.mrf.mxu0
        %v955 = vadd.f32 %v306, %v954
        %956 = vmatmul.f32.gmra.mxu0 %v553
        %v957 = vpop.f32.mrf.mxu0
        %v958 = vadd.f32 %v306, %v957
        %959 = vmatmul.f32.gmra.mxu0 %v556
        %v960 = vpop.f32.mrf.mxu0
        %v961 = vadd.f32 %v306, %v960
        %962 = vmatmul.f32.gmra.mxu0 %v559
        %v963 = vpop.f32.mrf.mxu0
        %v964 = vadd.f32 %v306, %v963
        %965 = vmatmul.f32.gmra.mxu0 %v562
        %v966 = vpop.f32.mrf.mxu0
        %v967 = vadd.f32 %v306, %v966
        %968 = vmatmul.f32.gmra.mxu0 %v565
        %v969 = vpop.f32.mrf.mxu0
        %v970 = vadd.f32 %v306, %v969
        %971 = vmatmul.f32.gmra.mxu0 %v568
        %v972 = vpop.f32.mrf.mxu0
        %v973 = vadd.f32 %v306, %v972
        %974 = vmatmul.f32.gmra.mxu0 %v571
        %v975 = vpop.f32.mrf.mxu0
        %v976 = vadd.f32 %v306, %v975
        %977 = vmatmul.f32.gmra.mxu0 %v574
        %v978 = vpop.f32.mrf.mxu0
        %v979 = vadd.f32 %v306, %v978
        %980 = vmatmul.f32.gmra.mxu0 %v577
        %v981 = vpop.f32.mrf.mxu0
        %v982 = vadd.f32 %v306, %v981
        %983 = vmatmul.f32.gmra.mxu0 %v580
        %v984 = vpop.f32.mrf.mxu0
        %v985 = vadd.f32 %v306, %v984
        %986 = vmatmul.f32.gmra.mxu0 %v583
        %v987 = vpop.f32.mrf.mxu0
        %v988 = vadd.f32 %v306, %v987
        %989 = vmatmul.f32.gmra.mxu0 %v586
        %v990 = vpop.f32.mrf.mxu0
        %v991 = vadd.f32 %v306, %v990
        %992 = vmatmul.f32.gmra.mxu0 %v589
        %v993 = vpop.f32.mrf.mxu0
        %v994 = vadd.f32 %v306, %v993
        %995 = vmatmul.f32.gmra.mxu0 %v592
        %v996 = vpop.f32.mrf.mxu0
        %v997 = vadd.f32 %v306, %v996
        %998 = vmatmul.f32.gmra.mxu0 %v595
        %v999 = vpop.f32.mrf.mxu0
        %v1000 = vadd.f32 %v306, %v999
        %1001 = vmatmul.f32.gmra.mxu0 %v598
        %v1002 = vpop.f32.mrf.mxu0
        %v1003 = vadd.f32 %v306, %v1002
        %1004 = vmatmul.f32.gmra.mxu0 %v601
        %v1005 = vpop.f32.mrf.mxu0
        %v1006 = vadd.f32 %v306, %v1005
        %1007 = vmatmul.f32.gmra.mxu0 %v604
        %v1008 = vpop.f32.mrf.mxu0
        %v1009 = vadd.f32 %v306, %v1008
        %1010 = vmatmul.f32.gmra.mxu0 %v607
        %v1011 = vpop.f32.mrf.mxu0
        %v1012 = vadd.f32 %v306, %v1011
        %1013 = vmatmul.f32.gmra.mxu0 %v610
        %v1014 = vpop.f32.mrf.mxu0
        %v1015 = vadd.f32 %v306, %v1014
        %1016 = vmatmul.f32.gmra.mxu0 %v613
        %v1017 = vpop.f32.mrf.mxu0
        %v1018 = vadd.f32 %v306, %v1017
        %1019 = vmatmul.f32.gmra.mxu0 %v616
        %v1020 = vpop.f32.mrf.mxu0
        %v1021 = vadd.f32 %v306, %v1020
        %1022 = vmatmul.f32.gmra.mxu0 %v619
        %v1023 = vpop.f32.mrf.mxu0
        %v1024 = vadd.f32 %v306, %v1023
        %1025 = vmatmul.f32.gmra.mxu0 %v622
        %v1026 = vpop.f32.mrf.mxu0
        %v1027 = vadd.f32 %v306, %v1026
        %1028 = vmatmul.f32.gmra.mxu0 %v625
        %v1029 = vpop.f32.mrf.mxu0
        %v1030 = vadd.f32 %v306, %v1029
        %1031 = vmatmul.f32.gmra.mxu0 %v628
        %v1032 = vpop.f32.mrf.mxu0
        %v1033 = vadd.f32 %v306, %v1032
        %1034 = vmatmul.f32.gmra.mxu0 %v631
        %v1035 = vpop.f32.mrf.mxu0
        %v1036 = vadd.f32 %v306, %v1035
        %1037 = vmatmul.f32.gmra.mxu0 %v634
        %v1038 = vpop.f32.mrf.mxu0
        %v1039 = vadd.f32 %v306, %v1038
        %1040 = vmatmul.f32.gmra.mxu0 %v637
        %v1041 = vpop.f32.mrf.mxu0
        %v1042 = vadd.f32 %v306, %v1041
        %1043 = vmatmul.f32.gmra.mxu0 %v640
        %v1044 = vpop.f32.mrf.mxu0
        %v1045 = vadd.f32 %v306, %v1044
        %1046 = vmatmul.f32.gmra.mxu0 %v643
        %v1047 = vpop.f32.mrf.mxu0
        %v1048 = vadd.f32 %v306, %v1047
        %1049 = vmatmul.f32.gmra.mxu0 %v646
        %v1050 = vpop.f32.mrf.mxu0
        %v1051 = vadd.f32 %v306, %v1050
        %1052 = vmatmul.f32.gmra.mxu0 %v649
        %v1053 = vpop.f32.mrf.mxu0
        %v1054 = vadd.f32 %v306, %v1053
        %1055 = vmatmul.f32.gmra.mxu0 %v652
        %v1056 = vpop.f32.mrf.mxu0
        %v1057 = vadd.f32 %v306, %v1056
        %1058 = vmatmul.f32.gmra.mxu0 %v655
        %v1059 = vpop.f32.mrf.mxu0
        %v1060 = vadd.f32 %v306, %v1059
        %1061 = vmatmul.f32.gmra.mxu0 %v658
        %v1062 = vpop.f32.mrf.mxu0
        %v1063 = vadd.f32 %v306, %v1062
        %1064 = vmatmul.f32.gmra.mxu0 %v661
        %v1065 = vpop.f32.mrf.mxu0
        %v1066 = vadd.f32 %v306, %v1065
        %1067 = vmatmul.f32.gmra.mxu0 %v664
        %v1068 = vpop.f32.mrf.mxu0
        %v1069 = vadd.f32 %v306, %v1068
        %1070 = vmatmul.f32.gmra.mxu0 %v667
        %v1071 = vpop.f32.mrf.mxu0
        %v1072 = vadd.f32 %v306, %v1071
        %1073 = vmatmul.f32.gmra.mxu0 %v670
        %v1074 = vpop.f32.mrf.mxu0
        %v1075 = vadd.f32 %v306, %v1074
        %1076 = vmatmul.f32.gmra.mxu0 %v673
        %v1077 = vpop.f32.mrf.mxu0
        %v1078 = vadd.f32 %v306, %v1077
        %1079 = vmatmul.f32.gmra.mxu0 %v676
        %v1080 = vpop.f32.mrf.mxu0
        %v1081 = vadd.f32 %v306, %v1080
        %1082 = vmatmul.f32.gmra.mxu0 %v679
        %v1083 = vpop.f32.mrf.mxu0
        %v1084 = vadd.f32 %v306, %v1083
        %1085 = vmatmul.f32.gmra.mxu0 %v682
        %v1086 = vpop.f32.mrf.mxu0
        %v1087 = vadd.f32 %v306, %v1086
        %1088 = vmatmul.f32.gmra.mxu0 %v685
        %v1089 = vpop.f32.mrf.mxu0
        %v1090 = vadd.f32 %v306, %v1089
        %1091 = vmatmul.f32.gmra.mxu0 %v688
        %v1092 = vpop.f32.mrf.mxu0
        %v1093 = vadd.f32 %v306, %v1092
        %1094 = vmatmul.f32.gmra.mxu0 %v691
        %v1095 = vpop.f32.mrf.mxu0
        %v1096 = vadd.f32 %v306, %v1095
        %1097 = vdwg.mxu0
        %1098 = vst [vmem:[%s164] sm:$0xff] %v715
        %1099 = vst [vmem:[%s164 + $0x8] sm:$0xff] %v718
        %1100 = vst [vmem:[%s164 + $0x10] sm:$0xff] %v721
        %1101 = vst [vmem:[%s164 + $0x18] sm:$0xff] %v724
        %1102 = vst [vmem:[%s164 + $0x20] sm:$0xff] %v727
        %1103 = vst [vmem:[%s164 + $0x28] sm:$0xff] %v730
        %1104 = vst [vmem:[%s164 + $0x30] sm:$0xff] %v733
        %1105 = vst [vmem:[%s164 + $0x38] sm:$0xff] %v736
        %1106 = vst [vmem:[%s164 + $0x40] sm:$0xff] %v739
        %1107 = vst [vmem:[%s164 + $0x48] sm:$0xff] %v742
        %1108 = vst [vmem:[%s164 + $0x50] sm:$0xff] %v745
        %1109 = vst [vmem:[%s164 + $0x58] sm:$0xff] %v748
        %1110 = vst [vmem:[%s164 + $0x60] sm:$0xff] %v751
        %1111 = vst [vmem:[%s164 + $0x68] sm:$0xff] %v754
        %1112 = vst [vmem:[%s164 + $0x70] sm:$0xff] %v757
        %1113 = vst [vmem:[%s164 + $0x78] sm:$0xff] %v760
        %1114 = vst [vmem:[%s164 + $0x80] sm:$0xff] %v763
        %1115 = vst [vmem:[%s164 + $0x88] sm:$0xff] %v766
        %1116 = vst [vmem:[%s164 + $0x90] sm:$0xff] %v769
        %1117 = vst [vmem:[%s164 + $0x98] sm:$0xff] %v772
        %1118 = vst [vmem:[%s164 + $0xa0] sm:$0xff] %v775
        %1119 = vst [vmem:[%s164 + $0xa8] sm:$0xff] %v778
        %1120 = vst [vmem:[%s164 + $0xb0] sm:$0xff] %v781
        %1121 = vst [vmem:[%s164 + $0xb8] sm:$0xff] %v784
        %1122 = vst [vmem:[%s164 + $0xc0] sm:$0xff] %v787
        %1123 = vst [vmem:[%s164 + $0xc8] sm:$0xff] %v790
        %1124 = vst [vmem:[%s164 + $0xd0] sm:$0xff] %v793
        %1125 = vst [vmem:[%s164 + $0xd8] sm:$0xff] %v796
        %1126 = vst [vmem:[%s164 + $0xe0] sm:$0xff] %v799
        %1127 = vst [vmem:[%s164 + $0xe8] sm:$0xff] %v802
        %1128 = vst [vmem:[%s164 + $0xf0] sm:$0xff] %v805
        %1129 = vst [vmem:[%s164 + $0xf8] sm:$0xff] %v808
        %1130 = vst [vmem:[%s164 + $0x100] sm:$0xff] %v811
        %1131 = vst [vmem:[%s164 + $0x108] sm:$0xff] %v814
        %1132 = vst [vmem:[%s164 + $0x110] sm:$0xff] %v817
        %1133 = vst [vmem:[%s164 + $0x118] sm:$0xff] %v820
        %1134 = vst [vmem:[%s164 + $0x120] sm:$0xff] %v823
        %1135 = vst [vmem:[%s164 + $0x128] sm:$0xff] %v826
        %1136 = vst [vmem:[%s164 + $0x130] sm:$0xff] %v829
        %1137 = vst [vmem:[%s164 + $0x138] sm:$0xff] %v832
        %1138 = vst [vmem:[%s164 + $0x140] sm:$0xff] %v835
        %1139 = vst [vmem:[%s164 + $0x148] sm:$0xff] %v838
        %1140 = vst [vmem:[%s164 + $0x150] sm:$0xff] %v841
        %1141 = vst [vmem:[%s164 + $0x158] sm:$0xff] %v844
        %1142 = vst [vmem:[%s164 + $0x160] sm:$0xff] %v847
        %1143 = vst [vmem:[%s164 + $0x168] sm:$0xff] %v850
        %1144 = vst [vmem:[%s164 + $0x170] sm:$0xff] %v853
        %1145 = vst [vmem:[%s164 + $0x178] sm:$0xff] %v856
        %1146 = vst [vmem:[%s164 + $0x180] sm:$0xff] %v859
        %1147 = vst [vmem:[%s164 + $0x188] sm:$0xff] %v862
        %1148 = vst [vmem:[%s164 + $0x190] sm:$0xff] %v865
        %1149 = vst [vmem:[%s164 + $0x198] sm:$0xff] %v868
        %1150 = vst [vmem:[%s164 + $0x1a0] sm:$0xff] %v871
        %1151 = vst [vmem:[%s164 + $0x1a8] sm:$0xff] %v874
        %1152 = vst [vmem:[%s164 + $0x1b0] sm:$0xff] %v877
        %1153 = vst [vmem:[%s164 + $0x1b8] sm:$0xff] %v880
        %1154 = vst [vmem:[%s164 + $0x1c0] sm:$0xff] %v883
        %1155 = vst [vmem:[%s164 + $0x1c8] sm:$0xff] %v886
        %1156 = vst [vmem:[%s164 + $0x1d0] sm:$0xff] %v889
        %1157 = vst [vmem:[%s164 + $0x1d8] sm:$0xff] %v892
        %1158 = vst [vmem:[%s164 + $0x1e0] sm:$0xff] %v895
        %1159 = vst [vmem:[%s164 + $0x1e8] sm:$0xff] %v898
        %1160 = vst [vmem:[%s164 + $0x1f0] sm:$0xff] %v901
        %1161 = vst [vmem:[%s164 + $0x1f8] sm:$0xff] %v904
        %1162 = vst [vmem:[%s164 + $0x200] sm:$0xff] %v907
        %1163 = vst [vmem:[%s164 + $0x208] sm:$0xff] %v910
        %1164 = vst [vmem:[%s164 + $0x210] sm:$0xff] %v913
        %1165 = vst [vmem:[%s164 + $0x218] sm:$0xff] %v916
        %1166 = vst [vmem:[%s164 + $0x220] sm:$0xff] %v919
        %1167 = vst [vmem:[%s164 + $0x228] sm:$0xff] %v922
        %1168 = vst [vmem:[%s164 + $0x230] sm:$0xff] %v925
        %1169 = vst [vmem:[%s164 + $0x238] sm:$0xff] %v928
        %1170 = vst [vmem:[%s164 + $0x240] sm:$0xff] %v931
        %1171 = vst [vmem:[%s164 + $0x248] sm:$0xff] %v934
        %1172 = vst [vmem:[%s164 + $0x250] sm:$0xff] %v937
        %1173 = vst [vmem:[%s164 + $0x258] sm:$0xff] %v940
        %1174 = vst [vmem:[%s164 + $0x260] sm:$0xff] %v943
        %1175 = vst [vmem:[%s164 + $0x268] sm:$0xff] %v946
        %1176 = vst [vmem:[%s164 + $0x270] sm:$0xff] %v949
        %1177 = vst [vmem:[%s164 + $0x278] sm:$0xff] %v952
        %1178 = vst [vmem:[%s164 + $0x280] sm:$0xff] %v955
        %1179 = vst [vmem:[%s164 + $0x288] sm:$0xff] %v958
        %1180 = vst [vmem:[%s164 + $0x290] sm:$0xff] %v961
        %1181 = vst [vmem:[%s164 + $0x298] sm:$0xff] %v964
        %1182 = vst [vmem:[%s164 + $0x2a0] sm:$0xff] %v967
        %1183 = vst [vmem:[%s164 + $0x2a8] sm:$0xff] %v970
        %1184 = vst [vmem:[%s164 + $0x2b0] sm:$0xff] %v973
        %1185 = vst [vmem:[%s164 + $0x2b8] sm:$0xff] %v976
        %1186 = vst [vmem:[%s164 + $0x2c0] sm:$0xff] %v979
        %1187 = vst [vmem:[%s164 + $0x2c8] sm:$0xff] %v982
        %1188 = vst [vmem:[%s164 + $0x2d0] sm:$0xff] %v985
        %1189 = vst [vmem:[%s164 + $0x2d8] sm:$0xff] %v988
        %1190 = vst [vmem:[%s164 + $0x2e0] sm:$0xff] %v991
        %1191 = vst [vmem:[%s164 + $0x2e8] sm:$0xff] %v994
        %1192 = vst [vmem:[%s164 + $0x2f0] sm:$0xff] %v997
        %1193 = vst [vmem:[%s164 + $0x2f8] sm:$0xff] %v1000
        %1194 = vst [vmem:[%s164 + $0x300] sm:$0xff] %v1003
        %1195 = vst [vmem:[%s164 + $0x308] sm:$0xff] %v1006
        %1196 = vst [vmem:[%s164 + $0x310] sm:$0xff] %v1009
        %1197 = vst [vmem:[%s164 + $0x318] sm:$0xff] %v1012
        %1198 = vst [vmem:[%s164 + $0x320] sm:$0xff] %v1015
        %1199 = vst [vmem:[%s164 + $0x328] sm:$0xff] %v1018
        %1200 = vst [vmem:[%s164 + $0x330] sm:$0xff] %v1021
        %1201 = vst [vmem:[%s164 + $0x338] sm:$0xff] %v1024
        %1202 = vst [vmem:[%s164 + $0x340] sm:$0xff] %v1027
        %1203 = vst [vmem:[%s164 + $0x348] sm:$0xff] %v1030
        %1204 = vst [vmem:[%s164 + $0x350] sm:$0xff] %v1033
        %1205 = vst [vmem:[%s164 + $0x358] sm:$0xff] %v1036
        %1206 = vst [vmem:[%s164 + $0x360] sm:$0xff] %v1039
        %1207 = vst [vmem:[%s164 + $0x368] sm:$0xff] %v1042
        %1208 = vst [vmem:[%s164 + $0x370] sm:$0xff] %v1045
        %1209 = vst [vmem:[%s164 + $0x378] sm:$0xff] %v1048
        %1210 = vst [vmem:[%s164 + $0x380] sm:$0xff] %v1051
        %1211 = vst [vmem:[%s164 + $0x388] sm:$0xff] %v1054
        %1212 = vst [vmem:[%s164 + $0x390] sm:$0xff] %v1057
        %1213 = vst [vmem:[%s164 + $0x398] sm:$0xff] %v1060
        %1214 = vst [vmem:[%s164 + $0x3a0] sm:$0xff] %v1063
        %1215 = vst [vmem:[%s164 + $0x3a8] sm:$0xff] %v1066
        %1216 = vst [vmem:[%s164 + $0x3b0] sm:$0xff] %v1069
        %1217 = vst [vmem:[%s164 + $0x3b8] sm:$0xff] %v1072
        %1218 = vst [vmem:[%s164 + $0x3c0] sm:$0xff] %v1075
        %1219 = vst [vmem:[%s164 + $0x3c8] sm:$0xff] %v1078
        %1220 = vst [vmem:[%s164 + $0x3d0] sm:$0xff] %v1081
        %1221 = vst [vmem:[%s164 + $0x3d8] sm:$0xff] %v1084
        %1222 = vst [vmem:[%s164 + $0x3e0] sm:$0xff] %v1087
        %1223 = vst [vmem:[%s164 + $0x3e8] sm:$0xff] %v1090
        %1224 = vst [vmem:[%s164 + $0x3f0] sm:$0xff] %v1093
        %1225 = vst [vmem:[%s164 + $0x3f8] sm:$0xff] %v1096
        %s1226 = sand.u32 %s93, 1
        %s1227 = scalar_lea.sflag [#allocation3], %s1226
        %s1228 = sand.u32 %s93, 1
        %s1229 = smul.addr %s1228, 1024
        %s1230 = scalar_lea.vmem [#allocation2], %s1229
        // Predicated region
        $region33: #{feature_converter.1} parent=31 // pred_check
          %p1231 = pneg %p103
        $region34: #{feature_converter.1} parent=31 // pred_check_branch
          %1233 = sbr.rel (%p1231) target = $region36
        $region35: #{feature_converter.1} parent=31 // pred_region
          %s1234 = smul.u32 128, %s17
          %1236 = vsyncadd %s1227, 0
          %s1237 = smul.addr %s1234, 8
          %s1238 = scalar_lea.hbm %s3, %s1237
          %s1239 = sshll.u32 %s1230, 4
          %s1240 = int_to_ptr.vmem [resolvable:$true] %s1239
          %s1241 = sshll.u32 %s1238, 4
          %s1242 = int_to_ptr.hbm [resolvable:$true] %s1241
          %1247 = dma.vmem_to_hbm [thread:$0]  %s1240, 16384, %s1242, %s1227, 128, 128, 8
        $region36: #{feature_converter.1} parent=31 // pred_fallthru
          _
      $region32: #{feature_converter.1} parent=5 // pred_fallthru
        _
      %p1248 = scmp.le.s32.totalorder 2, %s12
      // Predicated region
      $region37: #{feature_converter.1} parent=5 // pred_check
        %p1249 = pneg %p1248
      $region38: #{feature_converter.1} parent=5 // pred_check_branch
        %1251 = sbr.rel (%p1249) target = $region40
      $region39: #{feature_converter.1} parent=5 // pred_region
        %s1252 = ssub.s32 %s12, 2
        // Predicated region
        $region41: #{feature_converter.1} parent=39 // pred_check
          %p1253 = pneg %p109
        $region42: #{feature_converter.1} parent=39 // pred_check_branch
          %1255 = sbr.rel (%p1253) target = $region44
        $region43: #{feature_converter.1} parent=39 // pred_region
          %s1256 = sand.u32 %s94, 1
          %s1257 = scalar_lea.sflag [#allocation3], %s1256
          %s1258 = sand.u32 %s94, 1
          %s1259 = smul.addr %s1258, 1024
          %s1260 = scalar_lea.vmem [#allocation2], %s1259
          %1262 = dma.done %s1257, 16384
        $region44: #{feature_converter.1} parent=39 // pred_fallthru
          _
      $region40: #{feature_converter.1} parent=5 // pred_fallthru
        _
    $region6: #{feature_converter.1} parent=1 // loop_footer
      %s16 = sadd.s32 1, %s12
    $region7: #{feature_converter.1} parent=1 // loop_footer_branch
      %11 = sbr.rel target = $region3
    $region8: #{feature_converter.1} parent=1 // loop_exit
      _
    %1263 = vsyncpa [#allocation3], 1
    %s1264 = scalar_lea.sflag [#allocation3], 1
    %1265 = vsyncpa %s1264, 1

</llo_original>
